<compile_context>
chip_gen: v6e
topology: v6e:2x2x1
jax: 0.10.0
libtpu: 0.0.40
codegen_flags: <defaults>
</compile_context>

<pallas_src>
import functools

import jax
import jax.numpy as jnp
from jax.experimental import pallas as pl
from jax.experimental.pallas import tpu as pltpu

LOG_STD_MIN = -10.0
LOG_STD_MAX = 2.0
LN_EPS = 1e-5


def _round_up(x, m):
    return ((x + m - 1) // m) * m


def _pad_to(x, shape, dtype):
    out = jnp.zeros(shape, dtype)
    return out.at[tuple(slice(0, s) for s in x.shape)].set(x.astype(dtype))


def _actor_kernel(img_ref, prop_ref,
                  wp_ref, bp_ref,
                  w0a_ref, w0b_ref, b0_ref, g0_ref, be0_ref,
                  w1_ref, b1_ref,
                  w2m_ref, b2m_ref, w2s_ref, b2s_ref,
                  out_ref, *, hidden_true, a_pad):
    f32 = jnp.float32
    bf16 = jnp.bfloat16

    img = img_ref[...]            # bf16, (TB, OBS_P)
    prop = prop_ref[...]          # bf16, (TB, PD_P)

    # proprio_layer: Linear + ReLU (bf16 MXU, f32 accumulation)
    hp = jnp.dot(prop, wp_ref[...], preferred_element_type=f32) + bp_ref[...]
    hp = jnp.maximum(hp, 0.0)

    # trunk block 0 on hstack([img, hp]):  img @ W0a + hp @ W0b == concat(img, hp) @ W0
    h = (jnp.dot(img, w0a_ref[...], preferred_element_type=f32)
         + jnp.dot(hp.astype(bf16), w0b_ref[...], preferred_element_type=f32)
         + b0_ref[...])

    # LayerNorm over the *true* hidden width (padded lanes of h are exactly zero because
    # padded weight cols / bias lanes are zero).  Single-pass stats: var = E[h^2] - m^2.
    inv_h = 1.0 / hidden_true
    m = jnp.sum(h, axis=-1, keepdims=True) * inv_h
    ex2 = jnp.sum(h * h, axis=-1, keepdims=True) * inv_h
    var = ex2 - m * m
    h = (h - m) * jax.lax.rsqrt(var + LN_EPS) * g0_ref[...] + be0_ref[...]
    h = jnp.maximum(h, 0.0)

    # trunk block 1: Linear + ReLU
    h = jnp.dot(h.astype(bf16), w1_ref[...], preferred_element_type=f32) + b1_ref[...]
    h = jnp.maximum(h, 0.0)
    hb = h.astype(bf16)

    # output heads (pre-split W2 -> two lane-aligned matmuls, no in-kernel chunk slicing)
    mu = jnp.dot(hb, w2m_ref[...], preferred_element_type=f32) + b2m_ref[...]
    ls = jnp.dot(hb, w2s_ref[...], preferred_element_type=f32) + b2s_ref[...]
    ls = jnp.tanh(ls)
    ls = LOG_STD_MIN + 0.5 * (LOG_STD_MAX - LOG_STD_MIN) * (ls + 1.0)
    std = jnp.exp(ls)

    # lane-dense packed store: [ mu | std | tanh(mu) ], each head a_pad (=128k) lanes wide
    out_ref[:, :a_pad] = mu
    out_ref[:, a_pad:2 * a_pad] = std
    out_ref[:, 2 * a_pad:] = jnp.tanh(mu)   # SquashedNormal.mean = tanh(loc)


def prepare_actor_params(params, obs_dim, proprio_dim, proprio_expanded_dim,
                         hidden_dim, action_dim):
    """One-time: split W0/W2, pad every tensor to (8,128)-friendly shapes, cast weights
    to bf16.  Hoisted out of the per-call path."""
    f32, bf16 = jnp.float32, jnp.bfloat16
    obs_p = _round_up(obs_dim, 128)
    pd_p = _round_up(proprio_dim, 128)
    pe_p = _round_up(proprio_expanded_dim, 128)
    h_p = _round_up(hidden_dim, 128)
    a_p = _round_up(action_dim, 128)

    w0a = params["w0"][:obs_dim, :]
    w0b = params["w0"][obs_dim:, :]
    w2m = params["w2"][:, :action_dim]
    w2s = params["w2"][:, action_dim:]
    b2m = params["b2"][:, :action_dim]
    b2s = params["b2"][:, action_dim:]

    prep = dict(
        wp=_pad_to(params["wp"], (pd_p, pe_p), bf16),
        bp=_pad_to(params["bp"], (1, pe_p), f32),
        w0a=_pad_to(w0a, (obs_p, h_p), bf16),
        w0b=_pad_to(w0b, (pe_p, h_p), bf16),
        b0=_pad_to(params["b0"], (1, h_p), f32),
        # gamma is zero-padded (not one-padded) so padded lanes stay exactly 0 after LN
        g0=_pad_to(params["g0"], (1, h_p), f32),
        be0=_pad_to(params["be0"], (1, h_p), f32),
        w1=_pad_to(params["w1"], (h_p, h_p), bf16),
        b1=_pad_to(params["b1"], (1, h_p), f32),
        w2m=_pad_to(w2m, (h_p, a_p), bf16),
        b2m=_pad_to(b2m, (1, a_p), f32),
        w2s=_pad_to(w2s, (h_p, a_p), bf16),
        b2s=_pad_to(b2s, (1, a_p), f32),
        dims=dict(obs_dim=obs_dim, proprio_dim=proprio_dim, hidden_dim=hidden_dim,
                  action_dim=action_dim, obs_p=obs_p, pd_p=pd_p, pe_p=pe_p,
                  h_p=h_p, a_p=a_p),
    )
    return prep


def actor_forward(img_obs, proprios, prep):
    """Runs the fused, batch-tiled actor kernel.  Returns (mu, std, dist_mean)."""
    d = prep["dims"]
    obs_p, pd_p, pe_p, h_p, a_p = d["obs_p"], d["pd_p"], d["pe_p"], d["h_p"], d["a_p"]
    action_dim = d["action_dim"]
    B = img_obs.shape[0]

    # Batch tile: multiple of 8 sublanes, capped at 256 rows per grid step.
    tb = min(256, _round_up(max(B, 1), 8))
    b_pad = _round_up(B, tb)

    img_p = _pad_to(img_obs, (b_pad, obs_p), jnp.bfloat16)
    prop_p = _pad_to(proprios, (b_pad, pd_p), jnp.bfloat16)

    weights = (prep["wp"], prep["bp"],
               prep["w0a"], prep["w0b"], prep["b0"], prep["g0"], prep["be0"],
               prep["w1"], prep["b1"],
               prep["w2m"], prep["b2m"], prep["w2s"], prep["b2s"])

    _row = lambda i: (i, 0)     # batch-tiled activations / output
    _res = lambda i: (0, 0)     # weights: same block every step -> stay resident in VMEM

    in_specs = ([pl.BlockSpec((tb, obs_p), _row),
                 pl.BlockSpec((tb, pd_p), _row)]
                + [pl.BlockSpec(w.shape, _res) for w in weights])
    out_specs = pl.BlockSpec((tb, 3 * a_p), _row)
    out_shape = jax.ShapeDtypeStruct((b_pad, 3 * a_p), jnp.float32)

    flops = 2 * b_pad * (pd_p * pe_p + obs_p * h_p + pe_p * h_p + h_p * h_p
                         + 2 * h_p * a_p)
    bytes_accessed = (img_p.size * 2 + prop_p.size * 2
                      + sum(int(w.size) * w.dtype.itemsize for w in weights)
                      + b_pad * 3 * a_p * 4)
    cost = pl.CostEstimate(flops=flops,
                           transcendentals=b_pad * (3 * a_p + 1),
                           bytes_accessed=bytes_accessed)

    kernel = functools.partial(_actor_kernel,
                               hidden_true=float(d["hidden_dim"]),
                               a_pad=a_p)

    packed = pl.pallas_call(
        kernel,
        grid=(b_pad // tb,),
        in_specs=in_specs,
        out_specs=out_specs,
        out_shape=out_shape,
        compiler_params=pltpu.CompilerParams(
            dimension_semantics=("parallel",),     # megacore-shardable batch axis
            vmem_limit_bytes=32 * 1024 * 1024),
        cost_estimate=cost,
    )(img_p, prop_p, *weights)

    mu = packed[:B, :action_dim]
    std = packed[:B, a_p:a_p + action_dim]
    dist_mean = packed[:B, 2 * a_p:2 * a_p + action_dim]
    return mu, std, dist_mean


def _reference(img_obs, proprios, params, action_dim):
    """Pure-JAX reference mirroring the PyTorch module, with the same bf16 weight /
    activation quantization the kernel applies at each MXU feed."""
    bq = lambda x: x.astype(jnp.bfloat16).astype(jnp.float32)
    dot = lambda a, b: jnp.dot(bq(a), bq(b), precision=jax.lax.Precision.HIGHEST)

    hp = jnp.maximum(dot(proprios, params["wp"]) + params["bp"], 0.0)
    x = jnp.concatenate([img_obs, hp], axis=-1)
    h = dot(x, params["w0"]) + params["b0"]
    m = jnp.mean(h, axis=-1, keepdims=True)
    v = jnp.mean((h - m) ** 2, axis=-1, keepdims=True)
    h = (h - m) / jnp.sqrt(v + LN_EPS) * params["g0"] + params["be0"]
    h = jnp.maximum(h, 0.0)
    h = jnp.maximum(dot(h, params["w1"]) + params["b1"], 0.0)
    out = dot(h, params["w2"]) + params["b2"]
    mu, log_std = out[:, :action_dim], out[:, action_dim:]
    log_std = jnp.tanh(log_std)
    log_std = LOG_STD_MIN + 0.5 * (LOG_STD_MAX - LOG_STD_MIN) * (log_std + 1.0)
    return mu, jnp.exp(log_std), jnp.tanh(mu)


def init_params(key, obs_dim, action_dim, hidden_dim, proprio_dim, proprio_expanded_dim):
    ks = jax.random.split(key, 4)

    def lin(k, din, dout, scale=0.1):
        kw, kb = jax.random.split(k)
        w = jax.random.normal(kw, (din, dout), jnp.float32) * scale
        b = jax.random.normal(kb, (1, dout), jnp.float32) * 0.01
        return w, b

    wp, bp = lin(ks[0], proprio_dim, proprio_expanded_dim)
    w0, b0 = lin(ks[1], obs_dim + proprio_expanded_dim, hidden_dim)
    w1, b1 = lin(ks[2], hidden_dim, hidden_dim)
    w2, b2 = lin(ks[3], hidden_dim, 2 * action_dim)
    return dict(wp=wp, bp=bp, w0=w0, b0=b0,
                g0=jnp.ones((1, hidden_dim), jnp.float32),
                be0=jnp.zeros((1, hidden_dim), jnp.float32),
                w1=w1, b1=b1, w2=w2, b2=b2)


if __name__ == "__main__":
    B = 2
    obs_dim = 16               # pre-encoded image feature dim
    proprio_dim = 8
    proprio_expanded_dim = 16
    hidden_dim = 32
    action_dim = 4             # hidden_depth = 2, log_std_bounds = (-10, 2)

    key = jax.random.PRNGKey(0)
    k_img, k_prop, k_par = jax.random.split(key, 3)
    img_obs = jax.random.normal(k_img, (B, obs_dim), jnp.float32)
    proprios = jax.random.normal(k_prop, (B, proprio_dim), jnp.float32)
    params = init_params(k_par, obs_dim, action_dim, hidden_dim,
                         proprio_dim, proprio_expanded_dim)

    # One-time parameter preparation (pad / split / bf16 cast), hoisted out of the call path.
    prep = prepare_actor_params(params, obs_dim, proprio_dim, proprio_expanded_dim,
                                hidden_dim, action_dim)

    mu, std, dist_mean = actor_forward(img_obs, proprios, prep)
    jax.block_until_ready((mu, std, dist_mean))

    mu_r, std_r, mean_r = _reference(img_obs, proprios, params, action_dim)
    assert jnp.allclose(mu, mu_r, atol=1e-3, rtol=1e-3), float(jnp.max(jnp.abs(mu - mu_r)))
    assert jnp.allclose(std, std_r, atol=1e-3, rtol=1e-3), float(jnp.max(jnp.abs(std - std_r)))
    assert jnp.allclose(dist_mean, mean_r, atol=1e-3, rtol=1e-3), \
        float(jnp.max(jnp.abs(dist_mean - mean_r)))

    print("KERNEL_OK")
</pallas_src>

<mosaic_0001>
module attributes {stable_mosaic.version = 11 : i64} {
  func.func @_actor_kernel(%arg0: i32, %arg1: memref<8x128xbf16, #tpu.memory_space<vmem>>, %arg2: memref<8x128xbf16, #tpu.memory_space<vmem>>, %arg3: memref<128x128xbf16, #tpu.memory_space<vmem>>, %arg4: memref<1x128xf32, #tpu.memory_space<vmem>>, %arg5: memref<128x128xbf16, #tpu.memory_space<vmem>>, %arg6: memref<128x128xbf16, #tpu.memory_space<vmem>>, %arg7: memref<1x128xf32, #tpu.memory_space<vmem>>, %arg8: memref<1x128xf32, #tpu.memory_space<vmem>>, %arg9: memref<1x128xf32, #tpu.memory_space<vmem>>, %arg10: memref<128x128xbf16, #tpu.memory_space<vmem>>, %arg11: memref<1x128xf32, #tpu.memory_space<vmem>>, %arg12: memref<128x128xbf16, #tpu.memory_space<vmem>>, %arg13: memref<1x128xf32, #tpu.memory_space<vmem>>, %arg14: memref<128x128xbf16, #tpu.memory_space<vmem>>, %arg15: memref<1x128xf32, #tpu.memory_space<vmem>>, %arg16: memref<8x384xf32, #tpu.memory_space<vmem>>) attributes {dimension_semantics = [#tpu.dimension_semantics<parallel>], iteration_bounds = array<i64: 1>, scalar_prefetch = 0 : i64, scratch_operands = 0 : i64, tpu.core_type = #tpu.core_type<tc>, window_params = [{transform_indices = @transform_0, window_bounds = array<i64: 8, 128>}, {transform_indices = @transform_1, window_bounds = array<i64: 8, 128>}, {pipeline_mode = #tpu.pipeline_mode<synchronous>, transform_indices = @transform_2, window_bounds = array<i64: 128, 128>}, {pipeline_mode = #tpu.pipeline_mode<synchronous>, transform_indices = @transform_3, window_bounds = array<i64: 1, 128>}, {pipeline_mode = #tpu.pipeline_mode<synchronous>, transform_indices = @transform_4, window_bounds = array<i64: 128, 128>}, {pipeline_mode = #tpu.pipeline_mode<synchronous>, transform_indices = @transform_5, window_bounds = array<i64: 128, 128>}, {pipeline_mode = #tpu.pipeline_mode<synchronous>, transform_indices = @transform_6, window_bounds = array<i64: 1, 128>}, {pipeline_mode = #tpu.pipeline_mode<synchronous>, transform_indices = @transform_7, window_bounds = array<i64: 1, 128>}, {pipeline_mode = #tpu.pipeline_mode<synchronous>, transform_indices = @transform_8, window_bounds = array<i64: 1, 128>}, {pipeline_mode = #tpu.pipeline_mode<synchronous>, transform_indices = @transform_9, window_bounds = array<i64: 128, 128>}, {pipeline_mode = #tpu.pipeline_mode<synchronous>, transform_indices = @transform_10, window_bounds = array<i64: 1, 128>}, {pipeline_mode = #tpu.pipeline_mode<synchronous>, transform_indices = @transform_11, window_bounds = array<i64: 128, 128>}, {pipeline_mode = #tpu.pipeline_mode<synchronous>, transform_indices = @transform_12, window_bounds = array<i64: 1, 128>}, {pipeline_mode = #tpu.pipeline_mode<synchronous>, transform_indices = @transform_13, window_bounds = array<i64: 128, 128>}, {pipeline_mode = #tpu.pipeline_mode<synchronous>, transform_indices = @transform_14, window_bounds = array<i64: 1, 128>}, {transform_indices = @transform_15, window_bounds = array<i64: 8, 384>}]} {
    %c0 = arith.constant 0 : index
    %c0_0 = arith.constant 0 : index
    %0 = vector.load %arg1[%c0, %c0_0] : memref<8x128xbf16, #tpu.memory_space<vmem>>, vector<8x128xbf16>
    %c0_1 = arith.constant 0 : index
    %c0_2 = arith.constant 0 : index
    %1 = vector.load %arg2[%c0_1, %c0_2] : memref<8x128xbf16, #tpu.memory_space<vmem>>, vector<8x128xbf16>
    %c0_3 = arith.constant 0 : index
    %c0_4 = arith.constant 0 : index
    %2 = vector.load %arg3[%c0_3, %c0_4] : memref<128x128xbf16, #tpu.memory_space<vmem>>, vector<128x128xbf16>
    %cst = arith.constant dense<0.000000e+00> : vector<8x128xf32>
    %3 = tpu.matmul %1, %2, %cst {dimension_numbers = #tpu.dot_dimension_numbers<[1], [0], [0], [1], [0, 0, 1, 1], [], []>} : vector<8x128xbf16>, vector<128x128xbf16>, vector<8x128xf32> -> vector<8x128xf32>
    %c0_5 = arith.constant 0 : index
    %c0_6 = arith.constant 0 : index
    %4 = vector.load %arg4[%c0_5, %c0_6] : memref<1x128xf32, #tpu.memory_space<vmem>>, vector<1x128xf32>
    %5 = vector.broadcast %4 : vector<1x128xf32> to vector<8x128xf32>
    %6 = arith.addf %3, %5 : vector<8x128xf32>
    %cst_7 = arith.constant 0.000000e+00 : f32
    %7 = vector.broadcast %cst_7 : f32 to vector<8x128xf32>
    %8 = arith.maximumf %6, %7 : vector<8x128xf32>
    %c0_8 = arith.constant 0 : index
    %c0_9 = arith.constant 0 : index
    %9 = vector.load %arg5[%c0_8, %c0_9] : memref<128x128xbf16, #tpu.memory_space<vmem>>, vector<128x128xbf16>
    %cst_10 = arith.constant dense<0.000000e+00> : vector<8x128xf32>
    %10 = tpu.matmul %0, %9, %cst_10 {dimension_numbers = #tpu.dot_dimension_numbers<[1], [0], [0], [1], [0, 0, 1, 1], [], []>} : vector<8x128xbf16>, vector<128x128xbf16>, vector<8x128xf32> -> vector<8x128xf32>
    %11 = arith.truncf %8 : vector<8x128xf32> to vector<8x128xbf16>
    %c0_11 = arith.constant 0 : index
    %c0_12 = arith.constant 0 : index
    %12 = vector.load %arg6[%c0_11, %c0_12] : memref<128x128xbf16, #tpu.memory_space<vmem>>, vector<128x128xbf16>
    %cst_13 = arith.constant dense<0.000000e+00> : vector<8x128xf32>
    %13 = tpu.matmul %11, %12, %cst_13 {dimension_numbers = #tpu.dot_dimension_numbers<[1], [0], [0], [1], [0, 0, 1, 1], [], []>} : vector<8x128xbf16>, vector<128x128xbf16>, vector<8x128xf32> -> vector<8x128xf32>
    %14 = arith.addf %10, %13 : vector<8x128xf32>
    %c0_14 = arith.constant 0 : index
    %c0_15 = arith.constant 0 : index
    %15 = vector.load %arg7[%c0_14, %c0_15] : memref<1x128xf32, #tpu.memory_space<vmem>>, vector<1x128xf32>
    %16 = vector.broadcast %15 : vector<1x128xf32> to vector<8x128xf32>
    %17 = arith.addf %14, %16 : vector<8x128xf32>
    %cst_16 = arith.constant dense<0.000000e+00> : vector<8xf32>
    %18 = vector.multi_reduction <add>, %17, %cst_16 [1] : vector<8x128xf32> to vector<8xf32>
    %19 = vector.shape_cast %18 : vector<8xf32> to vector<8x1xf32>
    %cst_17 = arith.constant 3.125000e-02 : f32
    %20 = vector.broadcast %cst_17 : f32 to vector<8x1xf32>
    %21 = arith.mulf %19, %20 : vector<8x1xf32>
    %22 = arith.mulf %17, %17 : vector<8x128xf32>
    %cst_18 = arith.constant dense<0.000000e+00> : vector<8xf32>
    %23 = vector.multi_reduction <add>, %22, %cst_18 [1] : vector<8x128xf32> to vector<8xf32>
    %24 = vector.shape_cast %23 : vector<8xf32> to vector<8x1xf32>
    %cst_19 = arith.constant 3.125000e-02 : f32
    %25 = vector.broadcast %cst_19 : f32 to vector<8x1xf32>
    %26 = arith.mulf %24, %25 : vector<8x1xf32>
    %27 = arith.mulf %21, %21 : vector<8x1xf32>
    %28 = arith.subf %26, %27 : vector<8x1xf32>
    %29 = vector.broadcast %21 : vector<8x1xf32> to vector<8x128xf32>
    %30 = arith.subf %17, %29 : vector<8x128xf32>
    %cst_20 = arith.constant 9.99999974E-6 : f32
    %31 = vector.broadcast %cst_20 : f32 to vector<8x1xf32>
    %32 = arith.addf %28, %31 : vector<8x1xf32>
    %33 = math.rsqrt %32 : vector<8x1xf32>
    %34 = vector.broadcast %33 : vector<8x1xf32> to vector<8x128xf32>
    %35 = arith.mulf %30, %34 : vector<8x128xf32>
    %c0_21 = arith.constant 0 : index
    %c0_22 = arith.constant 0 : index
    %36 = vector.load %arg8[%c0_21, %c0_22] : memref<1x128xf32, #tpu.memory_space<vmem>>, vector<1x128xf32>
    %37 = vector.broadcast %36 : vector<1x128xf32> to vector<8x128xf32>
    %38 = arith.mulf %35, %37 : vector<8x128xf32>
    %c0_23 = arith.constant 0 : index
    %c0_24 = arith.constant 0 : index
    %39 = vector.load %arg9[%c0_23, %c0_24] : memref<1x128xf32, #tpu.memory_space<vmem>>, vector<1x128xf32>
    %40 = vector.broadcast %39 : vector<1x128xf32> to vector<8x128xf32>
    %41 = arith.addf %38, %40 : vector<8x128xf32>
    %cst_25 = arith.constant 0.000000e+00 : f32
    %42 = vector.broadcast %cst_25 : f32 to vector<8x128xf32>
    %43 = arith.maximumf %41, %42 : vector<8x128xf32>
    %44 = arith.truncf %43 : vector<8x128xf32> to vector<8x128xbf16>
    %c0_26 = arith.constant 0 : index
    %c0_27 = arith.constant 0 : index
    %45 = vector.load %arg10[%c0_26, %c0_27] : memref<128x128xbf16, #tpu.memory_space<vmem>>, vector<128x128xbf16>
    %cst_28 = arith.constant dense<0.000000e+00> : vector<8x128xf32>
    %46 = tpu.matmul %44, %45, %cst_28 {dimension_numbers = #tpu.dot_dimension_numbers<[1], [0], [0], [1], [0, 0, 1, 1], [], []>} : vector<8x128xbf16>, vector<128x128xbf16>, vector<8x128xf32> -> vector<8x128xf32>
    %c0_29 = arith.constant 0 : index
    %c0_30 = arith.constant 0 : index
    %47 = vector.load %arg11[%c0_29, %c0_30] : memref<1x128xf32, #tpu.memory_space<vmem>>, vector<1x128xf32>
    %48 = vector.broadcast %47 : vector<1x128xf32> to vector<8x128xf32>
    %49 = arith.addf %46, %48 : vector<8x128xf32>
    %cst_31 = arith.constant 0.000000e+00 : f32
    %50 = vector.broadcast %cst_31 : f32 to vector<8x128xf32>
    %51 = arith.maximumf %49, %50 : vector<8x128xf32>
    %52 = arith.truncf %51 : vector<8x128xf32> to vector<8x128xbf16>
    %c0_32 = arith.constant 0 : index
    %c0_33 = arith.constant 0 : index
    %53 = vector.load %arg12[%c0_32, %c0_33] : memref<128x128xbf16, #tpu.memory_space<vmem>>, vector<128x128xbf16>
    %cst_34 = arith.constant dense<0.000000e+00> : vector<8x128xf32>
    %54 = tpu.matmul %52, %53, %cst_34 {dimension_numbers = #tpu.dot_dimension_numbers<[1], [0], [0], [1], [0, 0, 1, 1], [], []>} : vector<8x128xbf16>, vector<128x128xbf16>, vector<8x128xf32> -> vector<8x128xf32>
    %c0_35 = arith.constant 0 : index
    %c0_36 = arith.constant 0 : index
    %55 = vector.load %arg13[%c0_35, %c0_36] : memref<1x128xf32, #tpu.memory_space<vmem>>, vector<1x128xf32>
    %56 = vector.broadcast %55 : vector<1x128xf32> to vector<8x128xf32>
    %57 = arith.addf %54, %56 : vector<8x128xf32>
    %c0_37 = arith.constant 0 : index
    %c0_38 = arith.constant 0 : index
    %58 = vector.load %arg14[%c0_37, %c0_38] : memref<128x128xbf16, #tpu.memory_space<vmem>>, vector<128x128xbf16>
    %cst_39 = arith.constant dense<0.000000e+00> : vector<8x128xf32>
    %59 = tpu.matmul %52, %58, %cst_39 {dimension_numbers = #tpu.dot_dimension_numbers<[1], [0], [0], [1], [0, 0, 1, 1], [], []>} : vector<8x128xbf16>, vector<128x128xbf16>, vector<8x128xf32> -> vector<8x128xf32>
    %c0_40 = arith.constant 0 : index
    %c0_41 = arith.constant 0 : index
    %60 = vector.load %arg15[%c0_40, %c0_41] : memref<1x128xf32, #tpu.memory_space<vmem>>, vector<1x128xf32>
    %61 = vector.broadcast %60 : vector<1x128xf32> to vector<8x128xf32>
    %62 = arith.addf %59, %61 : vector<8x128xf32>
    %63 = math.tanh %62 : vector<8x128xf32>
    %cst_42 = arith.constant 1.000000e+00 : f32
    %64 = vector.broadcast %cst_42 : f32 to vector<8x128xf32>
    %65 = arith.addf %63, %64 : vector<8x128xf32>
    %cst_43 = arith.constant 6.000000e+00 : f32
    %66 = vector.broadcast %cst_43 : f32 to vector<8x128xf32>
    %67 = arith.mulf %66, %65 : vector<8x128xf32>
    %cst_44 = arith.constant -1.000000e+01 : f32
    %68 = vector.broadcast %cst_44 : f32 to vector<8x128xf32>
    %69 = arith.addf %68, %67 : vector<8x128xf32>
    %70 = math.exp %69 : vector<8x128xf32>
    %c0_45 = arith.constant 0 : index
    %c0_46 = arith.constant 0 : index
    %71 = vector.load %arg16[%c0_45, %c0_46] : memref<8x384xf32, #tpu.memory_space<vmem>>, vector<8x128xf32>
    tpu.vector_store %arg16[%c0_45, %c0_46], %57 {strides = array<i32>} : memref<8x384xf32, #tpu.memory_space<vmem>>, vector<8x128xf32>,
    %c0_47 = arith.constant 0 : index
    %c128 = arith.constant 128 : index
    %72 = vector.load %arg16[%c0_47, %c128] : memref<8x384xf32, #tpu.memory_space<vmem>>, vector<8x128xf32>
    tpu.vector_store %arg16[%c0_47, %c128], %70 {strides = array<i32>} : memref<8x384xf32, #tpu.memory_space<vmem>>, vector<8x128xf32>,
    %73 = math.tanh %57 : vector<8x128xf32>
    %c0_48 = arith.constant 0 : index
    %c256 = arith.constant 256 : index
    %74 = vector.load %arg16[%c0_48, %c256] : memref<8x384xf32, #tpu.memory_space<vmem>>, vector<8x128xf32>
    tpu.vector_store %arg16[%c0_48, %c256], %73 {strides = array<i32>} : memref<8x384xf32, #tpu.memory_space<vmem>>, vector<8x128xf32>,
    return
  }
  func.func @transform_0(%arg0: i32) -> (i32, i32) {
    %c0_i32 = arith.constant 0 : i32
    %c0_i32_0 = arith.constant 0 : i32
    return %arg0, %c0_i32 : i32, i32
  }
  func.func @transform_1(%arg0: i32) -> (i32, i32) {
    %c0_i32 = arith.constant 0 : i32
    %c0_i32_0 = arith.constant 0 : i32
    return %arg0, %c0_i32 : i32, i32
  }
  func.func @transform_2(%arg0: i32) -> (i32, i32) {
    %c0_i32 = arith.constant 0 : i32
    %c0_i32_0 = arith.constant 0 : i32
    %c0_i32_1 = arith.constant 0 : i32
    return %c0_i32, %c0_i32_0 : i32, i32
  }
  func.func @transform_3(%arg0: i32) -> (i32, i32) {
    %c0_i32 = arith.constant 0 : i32
    %c0_i32_0 = arith.constant 0 : i32
    %c0_i32_1 = arith.constant 0 : i32
    return %c0_i32, %c0_i32_0 : i32, i32
  }
  func.func @transform_4(%arg0: i32) -> (i32, i32) {
    %c0_i32 = arith.constant 0 : i32
    %c0_i32_0 = arith.constant 0 : i32
    %c0_i32_1 = arith.constant 0 : i32
    return %c0_i32, %c0_i32_0 : i32, i32
  }
  func.func @transform_5(%arg0: i32) -> (i32, i32) {
    %c0_i32 = arith.constant 0 : i32
    %c0_i32_0 = arith.constant 0 : i32
    %c0_i32_1 = arith.constant 0 : i32
    return %c0_i32, %c0_i32_0 : i32, i32
  }
  func.func @transform_6(%arg0: i32) -> (i32, i32) {
    %c0_i32 = arith.constant 0 : i32
    %c0_i32_0 = arith.constant 0 : i32
    %c0_i32_1 = arith.constant 0 : i32
    return %c0_i32, %c0_i32_0 : i32, i32
  }
  func.func @transform_7(%arg0: i32) -> (i32, i32) {
    %c0_i32 = arith.constant 0 : i32
    %c0_i32_0 = arith.constant 0 : i32
    %c0_i32_1 = arith.constant 0 : i32
    return %c0_i32, %c0_i32_0 : i32, i32
  }
  func.func @transform_8(%arg0: i32) -> (i32, i32) {
    %c0_i32 = arith.constant 0 : i32
    %c0_i32_0 = arith.constant 0 : i32
    %c0_i32_1 = arith.constant 0 : i32
    return %c0_i32, %c0_i32_0 : i32, i32
  }
  func.func @transform_9(%arg0: i32) -> (i32, i32) {
    %c0_i32 = arith.constant 0 : i32
    %c0_i32_0 = arith.constant 0 : i32
    %c0_i32_1 = arith.constant 0 : i32
    return %c0_i32, %c0_i32_0 : i32, i32
  }
  func.func @transform_10(%arg0: i32) -> (i32, i32) {
    %c0_i32 = arith.constant 0 : i32
    %c0_i32_0 = arith.constant 0 : i32
    %c0_i32_1 = arith.constant 0 : i32
    return %c0_i32, %c0_i32_0 : i32, i32
  }
  func.func @transform_11(%arg0: i32) -> (i32, i32) {
    %c0_i32 = arith.constant 0 : i32
    %c0_i32_0 = arith.constant 0 : i32
    %c0_i32_1 = arith.constant 0 : i32
    return %c0_i32, %c0_i32_0 : i32, i32
  }
  func.func @transform_12(%arg0: i32) -> (i32, i32) {
    %c0_i32 = arith.constant 0 : i32
    %c0_i32_0 = arith.constant 0 : i32
    %c0_i32_1 = arith.constant 0 : i32
    return %c0_i32, %c0_i32_0 : i32, i32
  }
  func.func @transform_13(%arg0: i32) -> (i32, i32) {
    %c0_i32 = arith.constant 0 : i32
    %c0_i32_0 = arith.constant 0 : i32
    %c0_i32_1 = arith.constant 0 : i32
    return %c0_i32, %c0_i32_0 : i32, i32
  }
  func.func @transform_14(%arg0: i32) -> (i32, i32) {
    %c0_i32 = arith.constant 0 : i32
    %c0_i32_0 = arith.constant 0 : i32
    %c0_i32_1 = arith.constant 0 : i32
    return %c0_i32, %c0_i32_0 : i32, i32
  }
  func.func @transform_15(%arg0: i32) -> (i32, i32) {
    %c0_i32 = arith.constant 0 : i32
    %c0_i32_0 = arith.constant 0 : i32
    return %arg0, %c0_i32 : i32, i32
  }
}

</mosaic_0001>

<llo_original>
// kernel: tpu_custom_call.1
$region0: #{tpu_custom_call.1}
  #allocation0 [shape = 'u32[]', space=smem, size = 0x4, offset = 0x4, fixed_abs, tag = 'smem constant byte address 0x4 - core index']
  #allocation1 [shape = 'u32[144,128]{1,0:T(1,128)}', space=vmem, size = 0x12000, scoped, tag = 'internal scratch']
  %s0 = inlined_call_operand.hbm [shape: bf16[8,128], index: 0, kind: input, shape index: {}]
  %s1 = inlined_call_operand.hbm [shape: bf16[8,128], index: 1, kind: input, shape index: {}]
  %s2 = inlined_call_operand.hbm [shape: bf16[128,128], index: 2, kind: input, shape index: {}]
  %s3 = inlined_call_operand.vmem [shape: f32[1,128], index: 3, kind: input, shape index: {}]
  %s4 = inlined_call_operand.hbm [shape: bf16[128,128], index: 4, kind: input, shape index: {}]
  %s5 = inlined_call_operand.hbm [shape: bf16[128,128], index: 5, kind: input, shape index: {}]
  %s6 = inlined_call_operand.vmem [shape: f32[1,128], index: 6, kind: input, shape index: {}]
  %s7 = inlined_call_operand.vmem [shape: f32[1,128], index: 7, kind: input, shape index: {}]
  %s8 = inlined_call_operand.vmem [shape: f32[1,128], index: 8, kind: input, shape index: {}]
  %s9 = inlined_call_operand.hbm [shape: bf16[128,128], index: 9, kind: input, shape index: {}]
  %s10 = inlined_call_operand.vmem [shape: f32[1,128], index: 10, kind: input, shape index: {}]
  %s11 = inlined_call_operand.hbm [shape: bf16[128,128], index: 11, kind: input, shape index: {}]
  %s12 = inlined_call_operand.vmem [shape: f32[1,128], index: 12, kind: input, shape index: {}]
  %s13 = inlined_call_operand.hbm [shape: bf16[128,128], index: 13, kind: input, shape index: {}]
  %s14 = inlined_call_operand.vmem [shape: f32[1,128], index: 14, kind: input, shape index: {}]
  %s15 = inlined_call_operand.hbm [shape: f32[8,384], index: 15, kind: output, shape index: {}]
  %s16 = sld [smem:[#allocation0]]
  $region102: #{tpu_custom_call.1} parent=0
    _
  %s18 = ssub.s32 1, %s16
  %s19 = scalar_select 0, %s18, %s16
  $region1: #{tpu_custom_call.1} parent=0
    #allocation2 [shape = 'u8[2048]{0}', space=vmem, size = 0x800, scoped, tag = 'input window, operand 0, single buffered']
    #allocation3 [shape = 's32[1]{0}', space=sflag, size = 0x4, scoped, tag = 'scoped memory for tpu_custom_call.1']
    #allocation4 [shape = 's32[1]{0}', space=sflag, size = 0x4, scoped, tag = 'scoped memory for tpu_custom_call.1']
    #allocation5 [shape = 'u8[2048]{0}', space=vmem, size = 0x800, scoped, tag = 'input window, operand 1, single buffered']
    #allocation6 [shape = 's32[1]{0}', space=sflag, size = 0x4, scoped, tag = 'scoped memory for tpu_custom_call.1']
    #allocation7 [shape = 'u8[32768]{0}', space=vmem, size = 0x8000, scoped, tag = 'input window, operand 2, single buffered']
    #allocation8 [shape = 'u8[32768]{0}', space=vmem, size = 0x8000, scoped, tag = 'input window, operand 4, single buffered']
    #allocation9 [shape = 's32[1]{0}', space=sflag, size = 0x4, scoped, tag = 'scoped memory for tpu_custom_call.1']
    #allocation10 [shape = 'u8[32768]{0}', space=vmem, size = 0x8000, scoped, tag = 'input window, operand 5, single buffered']
    #allocation11 [shape = 'u8[32768]{0}', space=vmem, size = 0x8000, scoped, tag = 'input window, operand 9, single buffered']
    #allocation12 [shape = 's32[1]{0}', space=sflag, size = 0x4, scoped, tag = 'scoped memory for tpu_custom_call.1']
    #allocation13 [shape = 'u8[32768]{0}', space=vmem, size = 0x8000, scoped, tag = 'input window, operand 11, single buffered']
    #allocation14 [shape = 'u8[32768]{0}', space=vmem, size = 0x8000, scoped, tag = 'input window, operand 13, single buffered']
    #allocation15 [shape = 's32[1]{0}', space=sflag, size = 0x4, scoped, tag = 'scoped memory for tpu_custom_call.1']
    #allocation16 [shape = 'u8[12288]{0}', space=vmem, size = 0x3000, scoped, tag = 'output window, operand 0, single buffered']
    %20 = vsyncpa [#allocation3], 0
    %21 = vsyncpa [#allocation6], 0
    %22 = vsyncpa [#allocation9], 0
    %23 = vsyncpa [#allocation12], 0
    %24 = vsyncpa [#allocation15], 0
    %25 = vsyncpa [#allocation4], 0
    // Predicated region
    $region2: #{tpu_custom_call.1} parent=1 // pred_check
      _
    $region3: #{tpu_custom_call.1} parent=1 // pred_check_branch
      %27 = sbr.rel (0) target = $region5
    $region4: #{tpu_custom_call.1} parent=1 // pred_region
      %s29 = ssub.s32 64, 64
      %30 = vsyncadd [#allocation3], %s29
      %s32 = sshll.u32 [#allocation2], 4
      %s33 = int_to_ptr.vmem [resolvable:$true] %s32
      %35 = dma.hbm_to_vmem [thread:$0]  %s0, 64, %s33, [#allocation3]
    $region5: #{tpu_custom_call.1} parent=1 // pred_fallthru
      _
    // Predicated region
    $region6: #{tpu_custom_call.1} parent=1 // pred_check
      _
    $region7: #{tpu_custom_call.1} parent=1 // pred_check_branch
      %37 = sbr.rel (0) target = $region9
    $region8: #{tpu_custom_call.1} parent=1 // pred_region
      %s39 = ssub.s32 64, 64
      %40 = vsyncadd [#allocation6], %s39
      %s42 = sshll.u32 [#allocation5], 4
      %s43 = int_to_ptr.vmem [resolvable:$true] %s42
      %45 = dma.hbm_to_vmem [thread:$0]  %s1, 64, %s43, [#allocation6]
    $region9: #{tpu_custom_call.1} parent=1 // pred_fallthru
      _
    // Predicated region
    $region10: #{tpu_custom_call.1} parent=1 // pred_check
      _
    $region11: #{tpu_custom_call.1} parent=1 // pred_check_branch
      %47 = sbr.rel (0) target = $region13
    $region12: #{tpu_custom_call.1} parent=1 // pred_region
      %s49 = ssub.s32 1024, 1024
      %50 = vsyncadd [#allocation6], %s49
      %s51 = sshll.u32 [#allocation7], 4
      %s52 = int_to_ptr.vmem [resolvable:$true] %s51
      %57 = dma.hbm_to_vmem [thread:$0]  %s2, 1024, %s52, [#allocation6], 64, 64, 4
    $region13: #{tpu_custom_call.1} parent=1 // pred_fallthru
      _
    // Predicated region
    $region14: #{tpu_custom_call.1} parent=1 // pred_check
      _
    $region15: #{tpu_custom_call.1} parent=1 // pred_check_branch
      %59 = sbr.rel (0) target = $region17
    $region16: #{tpu_custom_call.1} parent=1 // pred_region
      _
    $region17: #{tpu_custom_call.1} parent=1 // pred_fallthru
      _
    // Predicated region
    $region18: #{tpu_custom_call.1} parent=1 // pred_check
      _
    $region19: #{tpu_custom_call.1} parent=1 // pred_check_branch
      %61 = sbr.rel (0) target = $region21
    $region20: #{tpu_custom_call.1} parent=1 // pred_region
      %s63 = ssub.s32 1024, 1024
      %64 = vsyncadd [#allocation9], %s63
      %s65 = sshll.u32 [#allocation8], 4
      %s66 = int_to_ptr.vmem [resolvable:$true] %s65
      %71 = dma.hbm_to_vmem [thread:$0]  %s4, 1024, %s66, [#allocation9], 64, 64, 4
    $region21: #{tpu_custom_call.1} parent=1 // pred_fallthru
      _
    // Predicated region
    $region22: #{tpu_custom_call.1} parent=1 // pred_check
      _
    $region23: #{tpu_custom_call.1} parent=1 // pred_check_branch
      %73 = sbr.rel (0) target = $region25
    $region24: #{tpu_custom_call.1} parent=1 // pred_region
      %s75 = ssub.s32 1024, 1024
      %76 = vsyncadd [#allocation9], %s75
      %s77 = sshll.u32 [#allocation10], 4
      %s78 = int_to_ptr.vmem [resolvable:$true] %s77
      %83 = dma.hbm_to_vmem [thread:$0]  %s5, 1024, %s78, [#allocation9], 64, 64, 4
    $region25: #{tpu_custom_call.1} parent=1 // pred_fallthru
      _
    // Predicated region
    $region26: #{tpu_custom_call.1} parent=1 // pred_check
      _
    $region27: #{tpu_custom_call.1} parent=1 // pred_check_branch
      %85 = sbr.rel (0) target = $region29
    $region28: #{tpu_custom_call.1} parent=1 // pred_region
      _
    $region29: #{tpu_custom_call.1} parent=1 // pred_fallthru
      _
    // Predicated region
    $region30: #{tpu_custom_call.1} parent=1 // pred_check
      _
    $region31: #{tpu_custom_call.1} parent=1 // pred_check_branch
      %87 = sbr.rel (0) target = $region33
    $region32: #{tpu_custom_call.1} parent=1 // pred_region
      _
    $region33: #{tpu_custom_call.1} parent=1 // pred_fallthru
      _
    // Predicated region
    $region34: #{tpu_custom_call.1} parent=1 // pred_check
      _
    $region35: #{tpu_custom_call.1} parent=1 // pred_check_branch
      %89 = sbr.rel (0) target = $region37
    $region36: #{tpu_custom_call.1} parent=1 // pred_region
      _
    $region37: #{tpu_custom_call.1} parent=1 // pred_fallthru
      _
    // Predicated region
    $region38: #{tpu_custom_call.1} parent=1 // pred_check
      _
    $region39: #{tpu_custom_call.1} parent=1 // pred_check_branch
      %91 = sbr.rel (0) target = $region41
    $region40: #{tpu_custom_call.1} parent=1 // pred_region
      %s93 = ssub.s32 1024, 1024
      %94 = vsyncadd [#allocation12], %s93
      %s95 = sshll.u32 [#allocation11], 4
      %s96 = int_to_ptr.vmem [resolvable:$true] %s95
      %101 = dma.hbm_to_vmem [thread:$0]  %s9, 1024, %s96, [#allocation12], 64, 64, 4
    $region41: #{tpu_custom_call.1} parent=1 // pred_fallthru
      _
    // Predicated region
    $region42: #{tpu_custom_call.1} parent=1 // pred_check
      _
    $region43: #{tpu_custom_call.1} parent=1 // pred_check_branch
      %103 = sbr.rel (0) target = $region45
    $region44: #{tpu_custom_call.1} parent=1 // pred_region
      _
    $region45: #{tpu_custom_call.1} parent=1 // pred_fallthru
      _
    // Predicated region
    $region46: #{tpu_custom_call.1} parent=1 // pred_check
      _
    $region47: #{tpu_custom_call.1} parent=1 // pred_check_branch
      %105 = sbr.rel (0) target = $region49
    $region48: #{tpu_custom_call.1} parent=1 // pred_region
      %s107 = ssub.s32 1024, 1024
      %108 = vsyncadd [#allocation12], %s107
      %s109 = sshll.u32 [#allocation13], 4
      %s110 = int_to_ptr.vmem [resolvable:$true] %s109
      %115 = dma.hbm_to_vmem [thread:$0]  %s11, 1024, %s110, [#allocation12], 64, 64, 4
    $region49: #{tpu_custom_call.1} parent=1 // pred_fallthru
      _
    // Predicated region
    $region50: #{tpu_custom_call.1} parent=1 // pred_check
      _
    $region51: #{tpu_custom_call.1} parent=1 // pred_check_branch
      %117 = sbr.rel (0) target = $region53
    $region52: #{tpu_custom_call.1} parent=1 // pred_region
      _
    $region53: #{tpu_custom_call.1} parent=1 // pred_fallthru
      _
    // Predicated region
    $region54: #{tpu_custom_call.1} parent=1 // pred_check
      _
    $region55: #{tpu_custom_call.1} parent=1 // pred_check_branch
      %119 = sbr.rel (0) target = $region57
    $region56: #{tpu_custom_call.1} parent=1 // pred_region
      %s121 = ssub.s32 1024, 1024
      %122 = vsyncadd [#allocation15], %s121
      %s123 = sshll.u32 [#allocation14], 4
      %s124 = int_to_ptr.vmem [resolvable:$true] %s123
      %129 = dma.hbm_to_vmem [thread:$0]  %s13, 1024, %s124, [#allocation15], 64, 64, 4
    $region57: #{tpu_custom_call.1} parent=1 // pred_fallthru
      _
    // Predicated region
    $region58: #{tpu_custom_call.1} parent=1 // pred_check
      _
    $region59: #{tpu_custom_call.1} parent=1 // pred_check_branch
      %131 = sbr.rel (0) target = $region61
    $region60: #{tpu_custom_call.1} parent=1 // pred_region
      _
    $region61: #{tpu_custom_call.1} parent=1 // pred_fallthru
      _
    // Predicated region
    $region62: #{tpu_custom_call.1} parent=1 // pred_check
      _
    $region63: #{tpu_custom_call.1} parent=1 // pred_check_branch
      %133 = sbr.rel (0) target = $region65
    $region64: #{tpu_custom_call.1} parent=1 // pred_region
      %134 = dma.done [#allocation3], 64
    $region65: #{tpu_custom_call.1} parent=1 // pred_fallthru
      _
    // Predicated region
    $region66: #{tpu_custom_call.1} parent=1 // pred_check
      _
    $region67: #{tpu_custom_call.1} parent=1 // pred_check_branch
      %136 = sbr.rel (0) target = $region69
    $region68: #{tpu_custom_call.1} parent=1 // pred_region
      %137 = dma.done [#allocation6], 64
    $region69: #{tpu_custom_call.1} parent=1 // pred_fallthru
      _
    // Predicated region
    $region70: #{tpu_custom_call.1} parent=1 // pred_check
      _
    $region71: #{tpu_custom_call.1} parent=1 // pred_check_branch
      %139 = sbr.rel (0) target = $region73
    $region72: #{tpu_custom_call.1} parent=1 // pred_region
      %140 = dma.done [#allocation6], 1024
    $region73: #{tpu_custom_call.1} parent=1 // pred_fallthru
      _
    // Predicated region
    $region74: #{tpu_custom_call.1} parent=1 // pred_check
      _
    $region75: #{tpu_custom_call.1} parent=1 // pred_check_branch
      %142 = sbr.rel (0) target = $region77
    $region76: #{tpu_custom_call.1} parent=1 // pred_region
      %143 = dma.done [#allocation9], 1024
    $region77: #{tpu_custom_call.1} parent=1 // pred_fallthru
      _
    // Predicated region
    $region78: #{tpu_custom_call.1} parent=1 // pred_check
      _
    $region79: #{tpu_custom_call.1} parent=1 // pred_check_branch
      %145 = sbr.rel (0) target = $region81
    $region80: #{tpu_custom_call.1} parent=1 // pred_region
      %146 = dma.done [#allocation9], 1024
    $region81: #{tpu_custom_call.1} parent=1 // pred_fallthru
      _
    // Predicated region
    $region82: #{tpu_custom_call.1} parent=1 // pred_check
      _
    $region83: #{tpu_custom_call.1} parent=1 // pred_check_branch
      %148 = sbr.rel (0) target = $region85
    $region84: #{tpu_custom_call.1} parent=1 // pred_region
      %149 = dma.done [#allocation12], 1024
    $region85: #{tpu_custom_call.1} parent=1 // pred_fallthru
      _
    // Predicated region
    $region86: #{tpu_custom_call.1} parent=1 // pred_check
      _
    $region87: #{tpu_custom_call.1} parent=1 // pred_check_branch
      %151 = sbr.rel (0) target = $region89
    $region88: #{tpu_custom_call.1} parent=1 // pred_region
      %152 = dma.done [#allocation12], 1024
    $region89: #{tpu_custom_call.1} parent=1 // pred_fallthru
      _
    // Predicated region
    $region90: #{tpu_custom_call.1} parent=1 // pred_check
      _
    $region91: #{tpu_custom_call.1} parent=1 // pred_check_branch
      %154 = sbr.rel (0) target = $region93
    $region92: #{tpu_custom_call.1} parent=1 // pred_region
      %155 = dma.done [#allocation15], 1024
    $region93: #{tpu_custom_call.1} parent=1 // pred_fallthru
      _
    %v157 = vld [vmem:[#allocation2] sm:$0xf]
    %v158 = vld [vmem:[#allocation5] sm:$0xf]
    %v159 = vld [vmem:[#allocation7] sm:$0xf]
    %v160 = vld [vmem:[#allocation7 + $0x4] sm:$0xf]
    %v161 = vld [vmem:[#allocation7 + $0x8] sm:$0xf]
    %v162 = vld [vmem:[#allocation7 + $0xc] sm:$0xf]
    %v163 = vld [vmem:[#allocation7 + $0x10] sm:$0xf]
    %v164 = vld [vmem:[#allocation7 + $0x14] sm:$0xf]
    %v165 = vld [vmem:[#allocation7 + $0x18] sm:$0xf]
    %v166 = vld [vmem:[#allocation7 + $0x1c] sm:$0xf]
    %v167 = vld [vmem:[#allocation7 + $0x20] sm:$0xf]
    %v168 = vld [vmem:[#allocation7 + $0x24] sm:$0xf]
    %v169 = vld [vmem:[#allocation7 + $0x28] sm:$0xf]
    %v170 = vld [vmem:[#allocation7 + $0x2c] sm:$0xf]
    %v171 = vld [vmem:[#allocation7 + $0x30] sm:$0xf]
    %v172 = vld [vmem:[#allocation7 + $0x34] sm:$0xf]
    %v173 = vld [vmem:[#allocation7 + $0x38] sm:$0xf]
    %v174 = vld [vmem:[#allocation7 + $0x3c] sm:$0xf]
    %v175 = vld [vmem:[%s3] sm:$0x1]
    %v177 = vlaneseq
    %v178 = vshrl.u32 %v177, 7
    %v179 = vsub.s32 0, %v178
    %v180 = vrot.slane %v175, %v179
    %v198 = vunpack.c.l.b16 %v159
    %v199 = vunpack.c.l.b16 %v160
    %v200 = vunpack.c.l.b16 %v161
    %v201 = vunpack.c.l.b16 %v162
    %v202 = vunpack.c.l.b16 %v163
    %v203 = vunpack.c.l.b16 %v164
    %v204 = vunpack.c.l.b16 %v165
    %v205 = vunpack.c.l.b16 %v166
    %v206 = vunpack.c.l.b16 %v167
    %v207 = vunpack.c.l.b16 %v168
    %v208 = vunpack.c.l.b16 %v169
    %v209 = vunpack.c.l.b16 %v170
    %v210 = vunpack.c.l.b16 %v171
    %v211 = vunpack.c.l.b16 %v172
    %v212 = vunpack.c.l.b16 %v173
    %v213 = vunpack.c.l.b16 %v174
    %v214 = vpack.c.b16 %v199, %v198
    %v215 = vpack.c.b16 %v201, %v200
    %v216 = vpack.c.b16 %v203, %v202
    %v217 = vpack.c.b16 %v205, %v204
    %v218 = vpack.c.b16 %v207, %v206
    %v219 = vpack.c.b16 %v209, %v208
    %v220 = vpack.c.b16 %v211, %v210
    %v221 = vpack.c.b16 %v213, %v212
    %230 = vmatprep.subr.bf16.mxu0 0
    %231 = vmatpush1.bf16.msra.mxu0 %v221
    %232 = vmatprep.subr.bf16.mxu0 0
    %233 = vmatpush1.bf16.msra.mxu0 %v220
    %234 = vmatprep.subr.bf16.mxu0 0
    %235 = vmatpush1.bf16.msra.mxu0 %v219
    %236 = vmatprep.subr.bf16.mxu0 0
    %237 = vmatpush1.bf16.msra.mxu0 %v218
    %238 = vmatprep.subr.bf16.mxu0 0
    %239 = vmatpush1.bf16.msra.mxu0 %v217
    %240 = vmatprep.subr.bf16.mxu0 0
    %241 = vmatpush1.bf16.msra.mxu0 %v216
    %242 = vmatprep.subr.bf16.mxu0 0
    %243 = vmatpush1.bf16.msra.mxu0 %v215
    %244 = vmatprep.subr.bf16.mxu0 0
    %245 = vmatpush1.bf16.msra.mxu0 %v214
    %246 = vmatprep.subr.bf16.mxu0 0
    %247 = vmatpush2.bf16.msra.mxu0 0
    %248 = vmatprep.subr.bf16.mxu0 0
    %249 = vmatpush2.bf16.msra.mxu0 0
    %250 = vmatprep.subr.bf16.mxu0 0
    %251 = vmatpush2.bf16.msra.mxu0 0
    %252 = vmatprep.subr.bf16.mxu0 0
    %253 = vmatpush2.bf16.msra.mxu0 0
    %254 = vmatprep.subr.bf16.mxu0 0
    %255 = vmatpush2.bf16.msra.mxu0 0
    %256 = vmatprep.subr.bf16.mxu0 0
    %257 = vmatpush2.bf16.msra.mxu0 0
    %258 = vmatprep.subr.bf16.mxu0 0
    %259 = vmatpush2.bf16.msra.mxu0 0
    %260 = vmatprep.subr.bf16.mxu0 0
    %261 = vmatpush2.bf16.msra.mxu0 0
    %262 = vmatprep.mubr.bf16.mxu0 0
    %263 = vmatmul.mubr.bf16.gmra.mxu0 %v158
    %v264 = vpop.f32.mrf.mxu0
    %v265 = vadd.f32 %v180, %v264
    %v266 = vpop.f32.mrf.mxu0
    %v267 = vpop.f32.mrf.mxu0
    %v268 = vpop.f32.mrf.mxu0
    %269 = vdwg.mxu0
    %v270 = vmax.f32 %v265, 0.0
    %v271 = vld [vmem:[#allocation8] sm:$0xf]
    %v272 = vld [vmem:[#allocation8 + $0x4] sm:$0xf]
    %v273 = vld [vmem:[#allocation8 + $0x8] sm:$0xf]
    %v274 = vld [vmem:[#allocation8 + $0xc] sm:$0xf]
    %v275 = vld [vmem:[#allocation8 + $0x10] sm:$0xf]
    %v276 = vld [vmem:[#allocation8 + $0x14] sm:$0xf]
    %v277 = vld [vmem:[#allocation8 + $0x18] sm:$0xf]
    %v278 = vld [vmem:[#allocation8 + $0x1c] sm:$0xf]
    %v279 = vld [vmem:[#allocation8 + $0x20] sm:$0xf]
    %v280 = vld [vmem:[#allocation8 + $0x24] sm:$0xf]
    %v281 = vld [vmem:[#allocation8 + $0x28] sm:$0xf]
    %v282 = vld [vmem:[#allocation8 + $0x2c] sm:$0xf]
    %v283 = vld [vmem:[#allocation8 + $0x30] sm:$0xf]
    %v284 = vld [vmem:[#allocation8 + $0x34] sm:$0xf]
    %v285 = vld [vmem:[#allocation8 + $0x38] sm:$0xf]
    %v286 = vld [vmem:[#allocation8 + $0x3c] sm:$0xf]
    %v287 = vpack.c.bf16 %v270, %v270
    %v288 = vld [vmem:[#allocation10] sm:$0xf]
    %v289 = vld [vmem:[#allocation10 + $0x4] sm:$0xf]
    %v290 = vld [vmem:[#allocation10 + $0x8] sm:$0xf]
    %v291 = vld [vmem:[#allocation10 + $0xc] sm:$0xf]
    %v292 = vld [vmem:[#allocation10 + $0x10] sm:$0xf]
    %v293 = vld [vmem:[#allocation10 + $0x14] sm:$0xf]
    %v294 = vld [vmem:[#allocation10 + $0x18] sm:$0xf]
    %v295 = vld [vmem:[#allocation10 + $0x1c] sm:$0xf]
    %v296 = vld [vmem:[#allocation10 + $0x20] sm:$0xf]
    %v297 = vld [vmem:[#allocation10 + $0x24] sm:$0xf]
    %v298 = vld [vmem:[#allocation10 + $0x28] sm:$0xf]
    %v299 = vld [vmem:[#allocation10 + $0x2c] sm:$0xf]
    %v300 = vld [vmem:[#allocation10 + $0x30] sm:$0xf]
    %v301 = vld [vmem:[#allocation10 + $0x34] sm:$0xf]
    %v302 = vld [vmem:[#allocation10 + $0x38] sm:$0xf]
    %v303 = vld [vmem:[#allocation10 + $0x3c] sm:$0xf]
    %v320 = vunpack.c.l.b16 %v288
    %v321 = vunpack.c.l.b16 %v289
    %v322 = vunpack.c.l.b16 %v290
    %v323 = vunpack.c.l.b16 %v291
    %v324 = vunpack.c.l.b16 %v292
    %v325 = vunpack.c.l.b16 %v293
    %v326 = vunpack.c.l.b16 %v294
    %v327 = vunpack.c.l.b16 %v295
    %v328 = vunpack.c.l.b16 %v296
    %v329 = vunpack.c.l.b16 %v297
    %v330 = vunpack.c.l.b16 %v298
    %v331 = vunpack.c.l.b16 %v299
    %v332 = vunpack.c.l.b16 %v300
    %v333 = vunpack.c.l.b16 %v301
    %v334 = vunpack.c.l.b16 %v302
    %v335 = vunpack.c.l.b16 %v303
    %v336 = vpack.c.b16 %v321, %v320
    %v337 = vpack.c.b16 %v323, %v322
    %v338 = vpack.c.b16 %v325, %v324
    %v339 = vpack.c.b16 %v327, %v326
    %v340 = vpack.c.b16 %v329, %v328
    %v341 = vpack.c.b16 %v331, %v330
    %v342 = vpack.c.b16 %v333, %v332
    %v343 = vpack.c.b16 %v335, %v334
    %352 = vmatprep.subr.bf16.mxu0 0
    %353 = vmatpush1.bf16.msra.mxu0 %v343
    %354 = vmatprep.subr.bf16.mxu0 0
    %355 = vmatpush1.bf16.msra.mxu0 %v342
    %356 = vmatprep.subr.bf16.mxu0 0
    %357 = vmatpush1.bf16.msra.mxu0 %v341
    %358 = vmatprep.subr.bf16.mxu0 0
    %359 = vmatpush1.bf16.msra.mxu0 %v340
    %360 = vmatprep.subr.bf16.mxu0 0
    %361 = vmatpush1.bf16.msra.mxu0 %v339
    %362 = vmatprep.subr.bf16.mxu0 0
    %363 = vmatpush1.bf16.msra.mxu0 %v338
    %364 = vmatprep.subr.bf16.mxu0 0
    %365 = vmatpush1.bf16.msra.mxu0 %v337
    %366 = vmatprep.subr.bf16.mxu0 0
    %367 = vmatpush1.bf16.msra.mxu0 %v336
    %368 = vmatprep.subr.bf16.mxu0 0
    %369 = vmatpush2.bf16.msra.mxu0 0
    %370 = vmatprep.subr.bf16.mxu0 0
    %371 = vmatpush2.bf16.msra.mxu0 0
    %372 = vmatprep.subr.bf16.mxu0 0
    %373 = vmatpush2.bf16.msra.mxu0 0
    %374 = vmatprep.subr.bf16.mxu0 0
    %375 = vmatpush2.bf16.msra.mxu0 0
    %376 = vmatprep.subr.bf16.mxu0 0
    %377 = vmatpush2.bf16.msra.mxu0 0
    %378 = vmatprep.subr.bf16.mxu0 0
    %379 = vmatpush2.bf16.msra.mxu0 0
    %380 = vmatprep.subr.bf16.mxu0 0
    %381 = vmatpush2.bf16.msra.mxu0 0
    %382 = vmatprep.subr.bf16.mxu0 0
    %383 = vmatpush2.bf16.msra.mxu0 0
    %384 = vmatprep.mubr.bf16.mxu0 0
    %385 = vmatmul.mubr.bf16.gmra.mxu0 %v287
    %v386 = vpop.f32.mrf.mxu0
    %v387 = vadd.f32 0.0, %v386
    %v388 = vpop.f32.mrf.mxu0
    %v389 = vpop.f32.mrf.mxu0
    %v390 = vpop.f32.mrf.mxu0
    %391 = vdwg.mxu0
    %v408 = vunpack.c.l.b16 %v271
    %v409 = vunpack.c.l.b16 %v272
    %v410 = vunpack.c.l.b16 %v273
    %v411 = vunpack.c.l.b16 %v274
    %v412 = vunpack.c.l.b16 %v275
    %v413 = vunpack.c.l.b16 %v276
    %v414 = vunpack.c.l.b16 %v277
    %v415 = vunpack.c.l.b16 %v278
    %v416 = vunpack.c.l.b16 %v279
    %v417 = vunpack.c.l.b16 %v280
    %v418 = vunpack.c.l.b16 %v281
    %v419 = vunpack.c.l.b16 %v282
    %v420 = vunpack.c.l.b16 %v283
    %v421 = vunpack.c.l.b16 %v284
    %v422 = vunpack.c.l.b16 %v285
    %v423 = vunpack.c.l.b16 %v286
    %v424 = vpack.c.b16 %v409, %v408
    %v425 = vpack.c.b16 %v411, %v410
    %v426 = vpack.c.b16 %v413, %v412
    %v427 = vpack.c.b16 %v415, %v414
    %v428 = vpack.c.b16 %v417, %v416
    %v429 = vpack.c.b16 %v419, %v418
    %v430 = vpack.c.b16 %v421, %v420
    %v431 = vpack.c.b16 %v423, %v422
    %440 = vmatprep.subr.bf16.mxu0 0
    %441 = vmatpush1.bf16.msra.mxu0 %v431
    %442 = vmatprep.subr.bf16.mxu0 0
    %443 = vmatpush1.bf16.msra.mxu0 %v430
    %444 = vmatprep.subr.bf16.mxu0 0
    %445 = vmatpush1.bf16.msra.mxu0 %v429
    %446 = vmatprep.subr.bf16.mxu0 0
    %447 = vmatpush1.bf16.msra.mxu0 %v428
    %448 = vmatprep.subr.bf16.mxu0 0
    %449 = vmatpush1.bf16.msra.mxu0 %v427
    %450 = vmatprep.subr.bf16.mxu0 0
    %451 = vmatpush1.bf16.msra.mxu0 %v426
    %452 = vmatprep.subr.bf16.mxu0 0
    %453 = vmatpush1.bf16.msra.mxu0 %v425
    %454 = vmatprep.subr.bf16.mxu0 0
    %455 = vmatpush1.bf16.msra.mxu0 %v424
    %456 = vmatprep.subr.bf16.mxu0 0
    %457 = vmatpush2.bf16.msra.mxu0 0
    %458 = vmatprep.subr.bf16.mxu0 0
    %459 = vmatpush2.bf16.msra.mxu0 0
    %460 = vmatprep.subr.bf16.mxu0 0
    %461 = vmatpush2.bf16.msra.mxu0 0
    %462 = vmatprep.subr.bf16.mxu0 0
    %463 = vmatpush2.bf16.msra.mxu0 0
    %464 = vmatprep.subr.bf16.mxu0 0
    %465 = vmatpush2.bf16.msra.mxu0 0
    %466 = vmatprep.subr.bf16.mxu0 0
    %467 = vmatpush2.bf16.msra.mxu0 0
    %468 = vmatprep.subr.bf16.mxu0 0
    %469 = vmatpush2.bf16.msra.mxu0 0
    %470 = vmatprep.subr.bf16.mxu0 0
    %471 = vmatpush2.bf16.msra.mxu0 0
    %472 = vmatprep.mubr.bf16.mxu0 0
    %473 = vmatmul.mubr.bf16.gmra.mxu0 %v157
    %v474 = vpop.f32.mrf.mxu0
    %v475 = vadd.f32 %v387, %v474
    %v476 = vpop.f32.mrf.mxu0
    %v477 = vpop.f32.mrf.mxu0
    %v478 = vpop.f32.mrf.mxu0
    %479 = vdwg.mxu0
    %v480 = vld [vmem:[%s6] sm:$0x1]
    %v482 = vlaneseq
    %v483 = vshrl.u32 %v482, 7
    %v484 = vsub.s32 0, %v483
    %v485 = vrot.slane %v480, %v484
    %v487 = vadd.f32 %v475, %v485
    %488 = vadd.xlane.f32.xlu0 %v487
    %v489 = vpop.xlane.xlu0 %488
    %v490 = vmul.f32 %v489, 0.03125
    %v491 = vmul.f32 %v487, %v487
    %492 = vadd.xlane.f32.xlu0 %v491
    %v493 = vpop.xlane.xlu0 %492
    %v494 = vmul.f32 %v493, 0.03125
    %v495 = vmul.f32 %v490, %v490
    %v496 = vsub.f32 %v494, %v495
    %v497 = vsub.f32 %v487, %v490
    %v498 = vadd.f32 %v496, 1e-05
    %v499 = vrsqrt.pop %v498
    %v500 = vmul.f32 %v497, %v499
    %v501 = vld [vmem:[%s7] sm:$0x1]
    %v503 = vlaneseq
    %v504 = vshrl.u32 %v503, 7
    %v505 = vsub.s32 0, %v504
    %v506 = vrot.slane %v501, %v505
    %v508 = vmul.f32 %v500, %v506
    %v509 = vld [vmem:[%s8] sm:$0x1]
    %v511 = vlaneseq
    %v512 = vshrl.u32 %v511, 7
    %v513 = vsub.s32 0, %v512
    %v514 = vrot.slane %v509, %v513
    %v516 = vadd.f32 %v508, %v514
    %v517 = vmax.f32 %v516, 0.0
    %v518 = vpack.c.bf16 %v517, %v517
    %v519 = vld [vmem:[#allocation11] sm:$0xf]
    %v520 = vld [vmem:[#allocation11 + $0x4] sm:$0xf]
    %v521 = vld [vmem:[#allocation11 + $0x8] sm:$0xf]
    %v522 = vld [vmem:[#allocation11 + $0xc] sm:$0xf]
    %v523 = vld [vmem:[#allocation11 + $0x10] sm:$0xf]
    %v524 = vld [vmem:[#allocation11 + $0x14] sm:$0xf]
    %v525 = vld [vmem:[#allocation11 + $0x18] sm:$0xf]
    %v526 = vld [vmem:[#allocation11 + $0x1c] sm:$0xf]
    %v527 = vld [vmem:[#allocation11 + $0x20] sm:$0xf]
    %v528 = vld [vmem:[#allocation11 + $0x24] sm:$0xf]
    %v529 = vld [vmem:[#allocation11 + $0x28] sm:$0xf]
    %v530 = vld [vmem:[#allocation11 + $0x2c] sm:$0xf]
    %v531 = vld [vmem:[#allocation11 + $0x30] sm:$0xf]
    %v532 = vld [vmem:[#allocation11 + $0x34] sm:$0xf]
    %v533 = vld [vmem:[#allocation11 + $0x38] sm:$0xf]
    %v534 = vld [vmem:[#allocation11 + $0x3c] sm:$0xf]
    %v535 = vld [vmem:[%s10] sm:$0x1]
    %v537 = vlaneseq
    %v538 = vshrl.u32 %v537, 7
    %v539 = vsub.s32 0, %v538
    %v540 = vrot.slane %v535, %v539
    %v558 = vunpack.c.l.b16 %v519
    %v559 = vunpack.c.l.b16 %v520
    %v560 = vunpack.c.l.b16 %v521
    %v561 = vunpack.c.l.b16 %v522
    %v562 = vunpack.c.l.b16 %v523
    %v563 = vunpack.c.l.b16 %v524
    %v564 = vunpack.c.l.b16 %v525
    %v565 = vunpack.c.l.b16 %v526
    %v566 = vunpack.c.l.b16 %v527
    %v567 = vunpack.c.l.b16 %v528
    %v568 = vunpack.c.l.b16 %v529
    %v569 = vunpack.c.l.b16 %v530
    %v570 = vunpack.c.l.b16 %v531
    %v571 = vunpack.c.l.b16 %v532
    %v572 = vunpack.c.l.b16 %v533
    %v573 = vunpack.c.l.b16 %v534
    %v574 = vpack.c.b16 %v559, %v558
    %v575 = vpack.c.b16 %v561, %v560
    %v576 = vpack.c.b16 %v563, %v562
    %v577 = vpack.c.b16 %v565, %v564
    %v578 = vpack.c.b16 %v567, %v566
    %v579 = vpack.c.b16 %v569, %v568
    %v580 = vpack.c.b16 %v571, %v570
    %v581 = vpack.c.b16 %v573, %v572
    %590 = vmatprep.subr.bf16.mxu0 0
    %591 = vmatpush1.bf16.msra.mxu0 %v581
    %592 = vmatprep.subr.bf16.mxu0 0
    %593 = vmatpush1.bf16.msra.mxu0 %v580
    %594 = vmatprep.subr.bf16.mxu0 0
    %595 = vmatpush1.bf16.msra.mxu0 %v579
    %596 = vmatprep.subr.bf16.mxu0 0
    %597 = vmatpush1.bf16.msra.mxu0 %v578
    %598 = vmatprep.subr.bf16.mxu0 0
    %599 = vmatpush1.bf16.msra.mxu0 %v577
    %600 = vmatprep.subr.bf16.mxu0 0
    %601 = vmatpush1.bf16.msra.mxu0 %v576
    %602 = vmatprep.subr.bf16.mxu0 0
    %603 = vmatpush1.bf16.msra.mxu0 %v575
    %604 = vmatprep.subr.bf16.mxu0 0
    %605 = vmatpush1.bf16.msra.mxu0 %v574
    %606 = vmatprep.subr.bf16.mxu0 0
    %607 = vmatpush2.bf16.msra.mxu0 0
    %608 = vmatprep.subr.bf16.mxu0 0
    %609 = vmatpush2.bf16.msra.mxu0 0
    %610 = vmatprep.subr.bf16.mxu0 0
    %611 = vmatpush2.bf16.msra.mxu0 0
    %612 = vmatprep.subr.bf16.mxu0 0
    %613 = vmatpush2.bf16.msra.mxu0 0
    %614 = vmatprep.subr.bf16.mxu0 0
    %615 = vmatpush2.bf16.msra.mxu0 0
    %616 = vmatprep.subr.bf16.mxu0 0
    %617 = vmatpush2.bf16.msra.mxu0 0
    %618 = vmatprep.subr.bf16.mxu0 0
    %619 = vmatpush2.bf16.msra.mxu0 0
    %620 = vmatprep.subr.bf16.mxu0 0
    %621 = vmatpush2.bf16.msra.mxu0 0
    %622 = vmatprep.mubr.bf16.mxu0 0
    %623 = vmatmul.mubr.bf16.gmra.mxu0 %v518
    %v624 = vpop.f32.mrf.mxu0
    %v625 = vadd.f32 %v540, %v624
    %v626 = vpop.f32.mrf.mxu0
    %v627 = vpop.f32.mrf.mxu0
    %v628 = vpop.f32.mrf.mxu0
    %629 = vdwg.mxu0
    %v630 = vmax.f32 %v625, 0.0
    %v631 = vpack.c.bf16 %v630, %v630
    %v632 = vld [vmem:[#allocation13] sm:$0xf]
    %v633 = vld [vmem:[#allocation13 + $0x4] sm:$0xf]
    %v634 = vld [vmem:[#allocation13 + $0x8] sm:$0xf]
    %v635 = vld [vmem:[#allocation13 + $0xc] sm:$0xf]
    %v636 = vld [vmem:[#allocation13 + $0x10] sm:$0xf]
    %v637 = vld [vmem:[#allocation13 + $0x14] sm:$0xf]
    %v638 = vld [vmem:[#allocation13 + $0x18] sm:$0xf]
    %v639 = vld [vmem:[#allocation13 + $0x1c] sm:$0xf]
    %v640 = vld [vmem:[#allocation13 + $0x20] sm:$0xf]
    %v641 = vld [vmem:[#allocation13 + $0x24] sm:$0xf]
    %v642 = vld [vmem:[#allocation13 + $0x28] sm:$0xf]
    %v643 = vld [vmem:[#allocation13 + $0x2c] sm:$0xf]
    %v644 = vld [vmem:[#allocation13 + $0x30] sm:$0xf]
    %v645 = vld [vmem:[#allocation13 + $0x34] sm:$0xf]
    %v646 = vld [vmem:[#allocation13 + $0x38] sm:$0xf]
    %v647 = vld [vmem:[#allocation13 + $0x3c] sm:$0xf]
    %v648 = vld [vmem:[%s12] sm:$0x1]
    %v650 = vlaneseq
    %v651 = vshrl.u32 %v650, 7
    %v652 = vsub.s32 0, %v651
    %v653 = vrot.slane %v648, %v652
    %v671 = vunpack.c.l.b16 %v632
    %v672 = vunpack.c.l.b16 %v633
    %v673 = vunpack.c.l.b16 %v634
    %v674 = vunpack.c.l.b16 %v635
    %v675 = vunpack.c.l.b16 %v636
    %v676 = vunpack.c.l.b16 %v637
    %v677 = vunpack.c.l.b16 %v638
    %v678 = vunpack.c.l.b16 %v639
    %v679 = vunpack.c.l.b16 %v640
    %v680 = vunpack.c.l.b16 %v641
    %v681 = vunpack.c.l.b16 %v642
    %v682 = vunpack.c.l.b16 %v643
    %v683 = vunpack.c.l.b16 %v644
    %v684 = vunpack.c.l.b16 %v645
    %v685 = vunpack.c.l.b16 %v646
    %v686 = vunpack.c.l.b16 %v647
    %v687 = vpack.c.b16 %v672, %v671
    %v688 = vpack.c.b16 %v674, %v673
    %v689 = vpack.c.b16 %v676, %v675
    %v690 = vpack.c.b16 %v678, %v677
    %v691 = vpack.c.b16 %v680, %v679
    %v692 = vpack.c.b16 %v682, %v681
    %v693 = vpack.c.b16 %v684, %v683
    %v694 = vpack.c.b16 %v686, %v685
    %703 = vmatprep.subr.bf16.mxu0 0
    %704 = vmatpush1.bf16.msra.mxu0 %v694
    %705 = vmatprep.subr.bf16.mxu0 0
    %706 = vmatpush1.bf16.msra.mxu0 %v693
    %707 = vmatprep.subr.bf16.mxu0 0
    %708 = vmatpush1.bf16.msra.mxu0 %v692
    %709 = vmatprep.subr.bf16.mxu0 0
    %710 = vmatpush1.bf16.msra.mxu0 %v691
    %711 = vmatprep.subr.bf16.mxu0 0
    %712 = vmatpush1.bf16.msra.mxu0 %v690
    %713 = vmatprep.subr.bf16.mxu0 0
    %714 = vmatpush1.bf16.msra.mxu0 %v689
    %715 = vmatprep.subr.bf16.mxu0 0
    %716 = vmatpush1.bf16.msra.mxu0 %v688
    %717 = vmatprep.subr.bf16.mxu0 0
    %718 = vmatpush1.bf16.msra.mxu0 %v687
    %719 = vmatprep.subr.bf16.mxu0 0
    %720 = vmatpush2.bf16.msra.mxu0 0
    %721 = vmatprep.subr.bf16.mxu0 0
    %722 = vmatpush2.bf16.msra.mxu0 0
    %723 = vmatprep.subr.bf16.mxu0 0
    %724 = vmatpush2.bf16.msra.mxu0 0
    %725 = vmatprep.subr.bf16.mxu0 0
    %726 = vmatpush2.bf16.msra.mxu0 0
    %727 = vmatprep.subr.bf16.mxu0 0
    %728 = vmatpush2.bf16.msra.mxu0 0
    %729 = vmatprep.subr.bf16.mxu0 0
    %730 = vmatpush2.bf16.msra.mxu0 0
    %731 = vmatprep.subr.bf16.mxu0 0
    %732 = vmatpush2.bf16.msra.mxu0 0
    %733 = vmatprep.subr.bf16.mxu0 0
    %734 = vmatpush2.bf16.msra.mxu0 0
    %735 = vmatprep.mubr.bf16.mxu0 0
    %736 = vmatmul.mubr.bf16.gmra.mxu0 %v631
    %v737 = vpop.f32.mrf.mxu0
    %v738 = vadd.f32 %v653, %v737
    %v739 = vpop.f32.mrf.mxu0
    %v740 = vpop.f32.mrf.mxu0
    %v741 = vpop.f32.mrf.mxu0
    %742 = vdwg.mxu0
    %v743 = vld [vmem:[#allocation14] sm:$0xf]
    %v744 = vld [vmem:[#allocation14 + $0x4] sm:$0xf]
    %v745 = vld [vmem:[#allocation14 + $0x8] sm:$0xf]
    %v746 = vld [vmem:[#allocation14 + $0xc] sm:$0xf]
    %v747 = vld [vmem:[#allocation14 + $0x10] sm:$0xf]
    %v748 = vld [vmem:[#allocation14 + $0x14] sm:$0xf]
    %v749 = vld [vmem:[#allocation14 + $0x18] sm:$0xf]
    %v750 = vld [vmem:[#allocation14 + $0x1c] sm:$0xf]
    %v751 = vld [vmem:[#allocation14 + $0x20] sm:$0xf]
    %v752 = vld [vmem:[#allocation14 + $0x24] sm:$0xf]
    %v753 = vld [vmem:[#allocation14 + $0x28] sm:$0xf]
    %v754 = vld [vmem:[#allocation14 + $0x2c] sm:$0xf]
    %v755 = vld [vmem:[#allocation14 + $0x30] sm:$0xf]
    %v756 = vld [vmem:[#allocation14 + $0x34] sm:$0xf]
    %v757 = vld [vmem:[#allocation14 + $0x38] sm:$0xf]
    %v758 = vld [vmem:[#allocation14 + $0x3c] sm:$0xf]
    %v759 = vld [vmem:[%s14] sm:$0x1]
    %v761 = vlaneseq
    %v762 = vshrl.u32 %v761, 7
    %v763 = vsub.s32 0, %v762
    %v764 = vrot.slane %v759, %v763
    %v782 = vunpack.c.l.b16 %v743
    %v783 = vunpack.c.l.b16 %v744
    %v784 = vunpack.c.l.b16 %v745
    %v785 = vunpack.c.l.b16 %v746
    %v786 = vunpack.c.l.b16 %v747
    %v787 = vunpack.c.l.b16 %v748
    %v788 = vunpack.c.l.b16 %v749
    %v789 = vunpack.c.l.b16 %v750
    %v790 = vunpack.c.l.b16 %v751
    %v791 = vunpack.c.l.b16 %v752
    %v792 = vunpack.c.l.b16 %v753
    %v793 = vunpack.c.l.b16 %v754
    %v794 = vunpack.c.l.b16 %v755
    %v795 = vunpack.c.l.b16 %v756
    %v796 = vunpack.c.l.b16 %v757
    %v797 = vunpack.c.l.b16 %v758
    %v798 = vpack.c.b16 %v783, %v782
    %v799 = vpack.c.b16 %v785, %v784
    %v800 = vpack.c.b16 %v787, %v786
    %v801 = vpack.c.b16 %v789, %v788
    %v802 = vpack.c.b16 %v791, %v790
    %v803 = vpack.c.b16 %v793, %v792
    %v804 = vpack.c.b16 %v795, %v794
    %v805 = vpack.c.b16 %v797, %v796
    %814 = vmatprep.subr.bf16.mxu0 0
    %815 = vmatpush1.bf16.msra.mxu0 %v805
    %816 = vmatprep.subr.bf16.mxu0 0
    %817 = vmatpush1.bf16.msra.mxu0 %v804
    %818 = vmatprep.subr.bf16.mxu0 0
    %819 = vmatpush1.bf16.msra.mxu0 %v803
    %820 = vmatprep.subr.bf16.mxu0 0
    %821 = vmatpush1.bf16.msra.mxu0 %v802
    %822 = vmatprep.subr.bf16.mxu0 0
    %823 = vmatpush1.bf16.msra.mxu0 %v801
    %824 = vmatprep.subr.bf16.mxu0 0
    %825 = vmatpush1.bf16.msra.mxu0 %v800
    %826 = vmatprep.subr.bf16.mxu0 0
    %827 = vmatpush1.bf16.msra.mxu0 %v799
    %828 = vmatprep.subr.bf16.mxu0 0
    %829 = vmatpush1.bf16.msra.mxu0 %v798
    %830 = vmatprep.subr.bf16.mxu0 0
    %831 = vmatpush2.bf16.msra.mxu0 0
    %832 = vmatprep.subr.bf16.mxu0 0
    %833 = vmatpush2.bf16.msra.mxu0 0
    %834 = vmatprep.subr.bf16.mxu0 0
    %835 = vmatpush2.bf16.msra.mxu0 0
    %836 = vmatprep.subr.bf16.mxu0 0
    %837 = vmatpush2.bf16.msra.mxu0 0
    %838 = vmatprep.subr.bf16.mxu0 0
    %839 = vmatpush2.bf16.msra.mxu0 0
    %840 = vmatprep.subr.bf16.mxu0 0
    %841 = vmatpush2.bf16.msra.mxu0 0
    %842 = vmatprep.subr.bf16.mxu0 0
    %843 = vmatpush2.bf16.msra.mxu0 0
    %844 = vmatprep.subr.bf16.mxu0 0
    %845 = vmatpush2.bf16.msra.mxu0 0
    %846 = vmatprep.mubr.bf16.mxu0 0
    %847 = vmatmul.mubr.bf16.gmra.mxu0 %v631
    %v848 = vpop.f32.mrf.mxu0
    %v849 = vadd.f32 %v764, %v848
    %v850 = vpop.f32.mrf.mxu0
    %v851 = vpop.f32.mrf.mxu0
    %v852 = vpop.f32.mrf.mxu0
    %853 = vdwg.mxu0
    %v854 = vtanh.pop %v849
    %v855 = vadd.f32 %v854, 1.0
    %v856 = vmul.f32 %v855, 6.0
    %v857 = vadd.f32 %v856, -10.0
    %v858 = vmul.f32 %v857, 1.442695
    %v859 = vpow.pop %v858
    %860 = vst [vmem:[#allocation16] sm:$0xff] %v738
    %861 = vst [vmem:[#allocation16 + $0x8] sm:$0xff] %v859
    %v862 = vtanh.pop %v738
    %863 = vst [vmem:[#allocation16 + $0x10] sm:$0xff] %v862
    // Predicated region
    $region94: #{tpu_custom_call.1} parent=1 // pred_check
      _
    $region95: #{tpu_custom_call.1} parent=1 // pred_check_branch
      %865 = sbr.rel (0) target = $region97
    $region96: #{tpu_custom_call.1} parent=1 // pred_region
      %s867 = ssub.s32 384, 384
      %868 = vsyncadd [#allocation4], %s867
      %s870 = sshll.u32 [#allocation16], 4
      %s871 = int_to_ptr.vmem [resolvable:$true] %s870
      %873 = dma.vmem_to_hbm [thread:$0]  %s871, 384, %s15, [#allocation4]
    $region97: #{tpu_custom_call.1} parent=1 // pred_fallthru
      _
    // Predicated region
    $region98: #{tpu_custom_call.1} parent=1 // pred_check
      _
    $region99: #{tpu_custom_call.1} parent=1 // pred_check_branch
      %875 = sbr.rel (0) target = $region101
    $region100: #{tpu_custom_call.1} parent=1 // pred_region
      %876 = dma.done [#allocation4], 384
    $region101: #{tpu_custom_call.1} parent=1 // pred_fallthru
      _
    %877 = vsyncpa [#allocation3], 1
    %878 = vsyncpa [#allocation6], 1
    %879 = vsyncpa [#allocation9], 1
    %880 = vsyncpa [#allocation12], 1
    %881 = vsyncpa [#allocation15], 1
    %882 = vsyncpa [#allocation4], 1

</llo_original>
